<compile_context>
chip_gen: v5e
topology: v5e:2x2
jax: 0.10.0
libtpu: 0.0.40
codegen_flags: <defaults>
</compile_context>

<pallas_src>
from functools import partial

import numpy as np
import jax
import jax.numpy as jnp
from jax import lax
from jax.experimental import pallas as pl
from jax.experimental.pallas import tpu as pltpu


# ----------------------------------------------------------------------------
# Tiling / sizing helpers
# ----------------------------------------------------------------------------
def _sublane_align(dtype):
    # Sublane packing: 8 rows for 4-byte, 16 for 2-byte, 32 for 1-byte dtypes.
    return max(8, 32 // max(jnp.dtype(dtype).itemsize, 1))


def _row_tile(n, target, dtype):
    """Fixed row tile: `target` rounded to the sublane packing, capped at the
    rounded-up row count. The grid uses pl.cdiv, so a partial last block is
    fine (rows are independent)."""
    a = _sublane_align(dtype)
    tgt = max(a, (target // a) * a)
    n_up = ((n + a - 1) // a) * a
    return min(tgt, n_up)


def _hidden_tile(h, target):
    """Largest multiple of 128 that divides H and is <= target. H is a
    contraction dim of the second matmul, so partial blocks are not allowed;
    fall back to the full H (single step) if no aligned divisor exists."""
    if h <= target:
        return h
    t = (min(target, h) // 128) * 128
    while t >= 128:
        if h % t == 0:
            return t
        t -= 128
    return h


def _vmem_limit(nbytes):
    # Size the scoped-VMEM limit to actual usage plus headroom, capped at the
    # smallest physical VMEM among target chips (v7x: 64 MiB per TensorCore).
    return int(min(max(2 * nbytes + (4 << 20), 16 << 20), 64 << 20))


# ----------------------------------------------------------------------------
# Pallas kernels
# ----------------------------------------------------------------------------
def _layernorm_kernel(x_ref, g_ref, b_ref, o_ref, *, eps):
    """Fused LayerNorm over the last dim of a (rows, D) tile (f32 math)."""
    x = x_ref[...].astype(jnp.float32)                       # (TR, D)
    mean = jnp.mean(x, axis=-1, keepdims=True)
    xc = x - mean
    var = jnp.mean(xc * xc, axis=-1, keepdims=True)          # biased var (PyTorch LN)
    y = xc * lax.rsqrt(var + eps)
    y = y * g_ref[...].astype(jnp.float32) + b_ref[...].astype(jnp.float32)
    o_ref[...] = y.astype(o_ref.dtype)


def _prenorm_ffn_kernel(x_ref, g_ref, b_ref, w1_ref, b1_ref, w2_ref, b2_ref,
                        o_ref, xn_ref, acc_ref, *, eps):
    """Fused PreNorm(FeedForward) with the hidden dim streamed on grid axis 1.

    Per row-block: at k==0 compute LayerNorm once into xn_ref (matmul dtype)
    and zero the f32 accumulator; per hidden tile k do
        acc += gelu(xn @ W1[:,k] + b1[k]) @ W2[k,:]
    and at the last k write out (acc + b2) in the output dtype.
    Matmul operands stay in the stored weight dtype (no f32 upcast); the MXU
    accumulates in f32 via preferred_element_type.
    """
    k = pl.program_id(1)

    @pl.when(k == 0)
    def _():
        x = x_ref[...].astype(jnp.float32)                    # (TR, D)
        mean = jnp.mean(x, axis=-1, keepdims=True)
        xc = x - mean
        var = jnp.mean(xc * xc, axis=-1, keepdims=True)
        xn = xc * lax.rsqrt(var + eps) * g_ref[...].astype(jnp.float32) \
             + b_ref[...].astype(jnp.float32)
        xn_ref[...] = xn.astype(xn_ref.dtype)
        acc_ref[...] = jnp.zeros_like(acc_ref)

    h = jnp.dot(xn_ref[...], w1_ref[...],
                preferred_element_type=jnp.float32)           # (TR, TH) f32
    h = h + b1_ref[...].astype(jnp.float32)
    # TODO(synk): PyTorch nn.GELU() defaults to exact erf GELU; this FeedForward
    #             (kernel AND reference) uses the tanh approximation.
    h = jax.nn.gelu(h, approximate=True)
    acc_ref[...] += jnp.dot(h.astype(w2_ref.dtype), w2_ref[...],
                            preferred_element_type=jnp.float32)

    @pl.when(k == pl.num_programs(1) - 1)
    def _():
        o_ref[...] = (acc_ref[...] + b2_ref[...].astype(jnp.float32)
                      ).astype(o_ref.dtype)


# ----------------------------------------------------------------------------
# pallas_call wrappers
# ----------------------------------------------------------------------------
def layer_norm(x, gamma, beta, eps=1e-5, block_rows=512):
    """Pallas LayerNorm over the last dimension (PyTorch nn.LayerNorm semantics)."""
    shape = x.shape
    D = shape[-1]
    N = int(np.prod(shape[:-1]))
    x2 = x.reshape(N, D)
    tr = _row_tile(N, block_rows, x.dtype)
    xi = x2.dtype.itemsize

    vmem = _vmem_limit(4 * tr * D * xi      # x + out tiles, double-buffered
                       + tr * D * 4         # f32 compute temporaries
                       + 4 * D * 4)         # gamma / beta

    out = pl.pallas_call(
        partial(_layernorm_kernel, eps=eps),
        out_shape=jax.ShapeDtypeStruct((N, D), x.dtype),
        grid=(pl.cdiv(N, tr),),
        in_specs=[
            pl.BlockSpec((tr, D), lambda i: (i, 0)),
            pl.BlockSpec((1, D), lambda i: (0, 0)),
            pl.BlockSpec((1, D), lambda i: (0, 0)),
        ],
        out_specs=pl.BlockSpec((tr, D), lambda i: (i, 0)),
        compiler_params=pltpu.CompilerParams(
            dimension_semantics=("parallel",),
            vmem_limit_bytes=vmem),
    )(x2, gamma.reshape(1, D), beta.reshape(1, D))
    return out.reshape(shape)


def prenorm_feedforward(x, gamma, beta, w1, b1, w2, b2, eps=1e-5,
                        block_rows=256, block_hidden=512):
    """Fused PreNorm(FeedForward) forward: fn(LayerNorm(x)) with fn = MLP."""
    shape = x.shape
    D = shape[-1]
    H = w1.shape[-1]
    N = int(np.prod(shape[:-1]))
    x2 = x.reshape(N, D)

    tr = _row_tile(N, block_rows, x.dtype)
    th = _hidden_tile(H, block_hidden)
    mm_dtype = w1.dtype                 # matmul dtype = stored weight dtype (no upcast)

    xi = x2.dtype.itemsize
    wi = jnp.dtype(mm_dtype).itemsize
    vmem = _vmem_limit(
        2 * tr * D * xi                 # x tile (double-buffered)
        + 2 * tr * D * xi               # out tile (double-buffered)
        + 2 * 2 * D * th * wi           # streamed W1/W2 tiles (double-buffered)
        + tr * D * wi                   # xn scratch
        + tr * D * 4                    # f32 accumulator
        + tr * th * 4                   # h intermediate
        + 8 * D * 4 + 4 * th * wi)      # gamma/beta/b1/b2

    cost = pl.CostEstimate(
        flops=int(4 * N * D * H),
        transcendentals=int(N * H),
        bytes_accessed=int(2 * N * D * xi + (w1.size + w2.size) * wi
                           + (b1.size + b2.size) * wi + 2 * D * 4))

    out = pl.pallas_call(
        partial(_prenorm_ffn_kernel, eps=eps),
        out_shape=jax.ShapeDtypeStruct((N, D), x.dtype),
        grid=(pl.cdiv(N, tr), pl.cdiv(H, th)),      # rows parallel, hidden last
        in_specs=[
            pl.BlockSpec((tr, D), lambda i, k: (i, 0)),   # x rows (resident over k)
            pl.BlockSpec((1, D), lambda i, k: (0, 0)),    # gamma (fetched once)
            pl.BlockSpec((1, D), lambda i, k: (0, 0)),    # beta
            pl.BlockSpec((D, th), lambda i, k: (0, k)),   # W1 hidden tile (streamed)
            pl.BlockSpec((1, th), lambda i, k: (0, k)),   # b1 hidden tile
            pl.BlockSpec((th, D), lambda i, k: (k, 0)),   # W2 hidden tile (streamed)
            pl.BlockSpec((1, D), lambda i, k: (0, 0)),    # b2
        ],
        out_specs=pl.BlockSpec((tr, D), lambda i, k: (i, 0)),
        scratch_shapes=[
            pltpu.VMEM((tr, D), mm_dtype),    # normalized activations (matmul dtype)
            pltpu.VMEM((tr, D), jnp.float32), # f32 accumulator of the 2nd matmul
        ],
        compiler_params=pltpu.CompilerParams(
            dimension_semantics=("parallel", "arbitrary"),
            vmem_limit_bytes=vmem),
        cost_estimate=cost,
    )(x2, gamma.reshape(1, D), beta.reshape(1, D),
      w1, b1.reshape(1, H), w2, b2.reshape(1, D))
    return out.reshape(shape)


# ----------------------------------------------------------------------------
# Module-level wrappers mirroring the PyTorch classes
# ----------------------------------------------------------------------------
class FeedForward:
    """MLP fn (Linear -> GELU(tanh) -> Linear), as commonly wrapped by PreNorm."""

    def __init__(self, dim, hidden, key, dtype=jnp.float32):
        k1, k2, k3, k4 = jax.random.split(key, 4)
        self.w1 = (jax.random.normal(k1, (dim, hidden), jnp.float32)
                   / np.sqrt(dim)).astype(dtype)
        self.b1 = (0.02 * jax.random.normal(k2, (hidden,), jnp.float32)).astype(dtype)
        self.w2 = (jax.random.normal(k3, (hidden, dim), jnp.float32)
                   / np.sqrt(hidden)).astype(dtype)
        self.b2 = (0.02 * jax.random.normal(k4, (dim,), jnp.float32)).astype(dtype)

    def __call__(self, x):  # pure-JAX path (also used as reference)
        h = jax.nn.gelu(
            jnp.dot(x, self.w1.astype(x.dtype), precision=lax.Precision.HIGHEST)
            + self.b1.astype(x.dtype), approximate=True)
        return (jnp.dot(h, self.w2.astype(x.dtype), precision=lax.Precision.HIGHEST)
                + self.b2.astype(x.dtype))


class PreNorm:
    """PreNorm(dim, fn): forward(x) = fn(LayerNorm(x))."""

    def __init__(self, dim, fn, block_rows=256, block_hidden=512):
        self.dim = dim
        self.fn = fn
        self.eps = 1e-5
        self.block_rows = block_rows
        self.block_hidden = block_hidden
        # nn.LayerNorm init (elementwise_affine=True): gamma=1, beta=0
        self.gamma = jnp.ones((dim,), jnp.float32)
        self.beta = jnp.zeros((dim,), jnp.float32)

    def __call__(self, x, **kwargs):
        if isinstance(self.fn, FeedForward) and not kwargs:
            # Fast path: LayerNorm + FFN fused in one Pallas kernel (normalized
            # activations never round-trip HBM; weights streamed per hidden tile).
            return prenorm_feedforward(x, self.gamma, self.beta,
                                       self.fn.w1, self.fn.b1,
                                       self.fn.w2, self.fn.b2,
                                       eps=self.eps,
                                       block_rows=self.block_rows,
                                       block_hidden=self.block_hidden)
        # Generic path: Pallas LayerNorm, then the arbitrary user fn.
        # TODO(synk): arbitrary wrapped `fn` modules run as plain JAX callables
        #             here rather than being lowered to Pallas.
        return self.fn(layer_norm(x, self.gamma, self.beta, self.eps,
                                  block_rows=self.block_rows), **kwargs)


# ----------------------------------------------------------------------------
# Pure-JAX reference
# ----------------------------------------------------------------------------
def ref_layer_norm(x, gamma, beta, eps=1e-5):
    m = jnp.mean(x, axis=-1, keepdims=True)
    v = jnp.mean((x - m) ** 2, axis=-1, keepdims=True)
    return (x - m) / jnp.sqrt(v + eps) * gamma + beta


# ----------------------------------------------------------------------------
if __name__ == "__main__":
    key = jax.random.PRNGKey(0)
    kx, kf, kg, kb = jax.random.split(key, 4)

    B, S, D, H = 2, 8, 32, 256
    x = jax.random.normal(kx, (B, S, D), jnp.float32)

    # PreNorm wrapping a FeedForward (fused Pallas path). Small tiles so the
    # 2-D grid (row x hidden) has multiple steps and exercises the
    # init / accumulate / finalize path.
    ffn = FeedForward(D, H, kf)
    block = PreNorm(D, ffn, block_rows=8, block_hidden=128)
    block.gamma = 1.0 + 0.1 * jax.random.normal(kg, (D,), jnp.float32)
    block.beta = 0.1 * jax.random.normal(kb, (D,), jnp.float32)
    out_fused = jax.block_until_ready(block(x))

    # PreNorm wrapping an arbitrary fn (Pallas LayerNorm + plain JAX fn).
    generic = PreNorm(D, lambda z: jnp.tanh(z) * 2.0, block_rows=8)
    generic.gamma, generic.beta = block.gamma, block.beta
    out_generic = jax.block_until_ready(generic(x))

    # Odd row count -> exercises the pl.cdiv partial last row block.
    x_odd = jax.random.normal(kx, (3, 5, D), jnp.float32)
    out_odd = jax.block_until_ready(
        layer_norm(x_odd, block.gamma, block.beta, eps=1e-5, block_rows=8))

    # References.
    ref_fused = ffn(ref_layer_norm(x, block.gamma, block.beta))
    ref_generic = jnp.tanh(ref_layer_norm(x, block.gamma, block.beta)) * 2.0
    ref_odd = ref_layer_norm(x_odd, block.gamma, block.beta)

    assert out_fused.shape == (B, S, D), out_fused.shape
    assert out_generic.shape == (B, S, D), out_generic.shape
    np.testing.assert_allclose(np.asarray(out_fused), np.asarray(ref_fused),
                               rtol=2e-3, atol=2e-3)
    np.testing.assert_allclose(np.asarray(out_generic), np.asarray(ref_generic),
                               rtol=2e-3, atol=2e-3)
    np.testing.assert_allclose(np.asarray(out_odd), np.asarray(ref_odd),
                               rtol=2e-3, atol=2e-3)
    print("KERNEL_OK")
</pallas_src>

<mosaic_0001>
module attributes {stable_mosaic.version = 11 : i64} {
  func.func @_prenorm_ffn_kernel(%arg0: i32, %arg1: i32, %arg2: memref<8x32xf32, #tpu.memory_space<vmem>>, %arg3: memref<1x32xf32, #tpu.memory_space<vmem>>, %arg4: memref<1x32xf32, #tpu.memory_space<vmem>>, %arg5: memref<32x128xf32, #tpu.memory_space<vmem>>, %arg6: memref<1x128xf32, #tpu.memory_space<vmem>>, %arg7: memref<128x32xf32, #tpu.memory_space<vmem>>, %arg8: memref<1x32xf32, #tpu.memory_space<vmem>>, %arg9: memref<8x32xf32, #tpu.memory_space<vmem>>, %arg10: memref<8x32xf32, #tpu.memory_space<vmem>>, %arg11: memref<8x32xf32, #tpu.memory_space<vmem>>) attributes {dimension_semantics = [#tpu.dimension_semantics<parallel>, #tpu.dimension_semantics<arbitrary>], iteration_bounds = array<i64: 2, 2>, scalar_prefetch = 0 : i64, scratch_operands = 2 : i64, tpu.core_type = #tpu.core_type<tc>, window_params = [{transform_indices = @transform_0, window_bounds = array<i64: 8, 32>}, {pipeline_mode = #tpu.pipeline_mode<synchronous>, transform_indices = @transform_1, window_bounds = array<i64: 1, 32>}, {pipeline_mode = #tpu.pipeline_mode<synchronous>, transform_indices = @transform_2, window_bounds = array<i64: 1, 32>}, {transform_indices = @transform_3, window_bounds = array<i64: 32, 128>}, {transform_indices = @transform_4, window_bounds = array<i64: 1, 128>}, {transform_indices = @transform_5, window_bounds = array<i64: 128, 32>}, {pipeline_mode = #tpu.pipeline_mode<synchronous>, transform_indices = @transform_6, window_bounds = array<i64: 1, 32>}, {transform_indices = @transform_7, window_bounds = array<i64: 8, 32>}]} {
    %c0_i32 = arith.constant 0 : i32
    %0 = arith.cmpi eq, %arg1, %c0_i32 : i32
    %1 = arith.extui %0 : i1 to i32
    %c0_i32_0 = arith.constant 0 : i32
    %2 = arith.cmpi ne, %1, %c0_i32_0 : i32
    scf.if %2 {
      %c0_18 = arith.constant 0 : index
      %c0_19 = arith.constant 0 : index
      %30 = vector.load %arg2[%c0_18, %c0_19] : memref<8x32xf32, #tpu.memory_space<vmem>>, vector<8x32xf32>
      %cst_20 = arith.constant dense<0.000000e+00> : vector<8xf32>
      %31 = vector.multi_reduction <add>, %30, %cst_20 [1] : vector<8x32xf32> to vector<8xf32>
      %32 = vector.shape_cast %31 : vector<8xf32> to vector<8x1xf32>
      %cst_21 = arith.constant 3.200000e+01 : f32
      %33 = vector.broadcast %cst_21 : f32 to vector<8x1xf32>
      %34 = arith.divf %32, %33 : vector<8x1xf32>
      %35 = vector.broadcast %34 : vector<8x1xf32> to vector<8x32xf32>
      %36 = arith.subf %30, %35 : vector<8x32xf32>
      %37 = arith.mulf %36, %36 : vector<8x32xf32>
      %cst_22 = arith.constant dense<0.000000e+00> : vector<8xf32>
      %38 = vector.multi_reduction <add>, %37, %cst_22 [1] : vector<8x32xf32> to vector<8xf32>
      %39 = vector.shape_cast %38 : vector<8xf32> to vector<8x1xf32>
      %cst_23 = arith.constant 3.200000e+01 : f32
      %40 = vector.broadcast %cst_23 : f32 to vector<8x1xf32>
      %41 = arith.divf %39, %40 : vector<8x1xf32>
      %cst_24 = arith.constant 9.99999974E-6 : f32
      %42 = vector.broadcast %cst_24 : f32 to vector<8x1xf32>
      %43 = arith.addf %41, %42 : vector<8x1xf32>
      %44 = math.rsqrt %43 : vector<8x1xf32>
      %45 = vector.broadcast %44 : vector<8x1xf32> to vector<8x32xf32>
      %46 = arith.mulf %36, %45 : vector<8x32xf32>
      %c0_25 = arith.constant 0 : index
      %c0_26 = arith.constant 0 : index
      %47 = vector.load %arg3[%c0_25, %c0_26] : memref<1x32xf32, #tpu.memory_space<vmem>>, vector<1x32xf32>
      %48 = vector.broadcast %47 : vector<1x32xf32> to vector<8x32xf32>
      %49 = arith.mulf %46, %48 : vector<8x32xf32>
      %c0_27 = arith.constant 0 : index
      %c0_28 = arith.constant 0 : index
      %50 = vector.load %arg4[%c0_27, %c0_28] : memref<1x32xf32, #tpu.memory_space<vmem>>, vector<1x32xf32>
      %51 = vector.broadcast %50 : vector<1x32xf32> to vector<8x32xf32>
      %52 = arith.addf %49, %51 : vector<8x32xf32>
      %c0_29 = arith.constant 0 : index
      %c0_30 = arith.constant 0 : index
      %53 = vector.load %arg10[%c0_29, %c0_30] : memref<8x32xf32, #tpu.memory_space<vmem>>, vector<8x32xf32>
      tpu.vector_store %arg10[%c0_29, %c0_30], %52 {strides = array<i32>} : memref<8x32xf32, #tpu.memory_space<vmem>>, vector<8x32xf32>,
      %cst_31 = arith.constant 0.000000e+00 : f32
      %54 = vector.broadcast %cst_31 : f32 to vector<8x32xf32>
      %c0_32 = arith.constant 0 : index
      %c0_33 = arith.constant 0 : index
      %55 = vector.load %arg11[%c0_32, %c0_33] : memref<8x32xf32, #tpu.memory_space<vmem>>, vector<8x32xf32>
      tpu.vector_store %arg11[%c0_32, %c0_33], %54 {strides = array<i32>} : memref<8x32xf32, #tpu.memory_space<vmem>>, vector<8x32xf32>,
    } else {
    }
    %c0 = arith.constant 0 : index
    %c0_1 = arith.constant 0 : index
    %3 = vector.load %arg10[%c0, %c0_1] : memref<8x32xf32, #tpu.memory_space<vmem>>, vector<8x32xf32>
    %c0_2 = arith.constant 0 : index
    %c0_3 = arith.constant 0 : index
    %4 = vector.load %arg5[%c0_2, %c0_3] : memref<32x128xf32, #tpu.memory_space<vmem>>, vector<32x128xf32>
    %cst = arith.constant dense<0.000000e+00> : vector<8x128xf32>
    %5 = tpu.matmul %3, %4, %cst {dimension_numbers = #tpu.dot_dimension_numbers<[1], [0], [0], [1], [0, 0, 1, 1], [], []>} : vector<8x32xf32>, vector<32x128xf32>, vector<8x128xf32> -> vector<8x128xf32>
    %c0_4 = arith.constant 0 : index
    %c0_5 = arith.constant 0 : index
    %6 = vector.load %arg6[%c0_4, %c0_5] : memref<1x128xf32, #tpu.memory_space<vmem>>, vector<1x128xf32>
    %7 = vector.broadcast %6 : vector<1x128xf32> to vector<8x128xf32>
    %8 = arith.addf %5, %7 : vector<8x128xf32>
    %9 = arith.mulf %8, %8 : vector<8x128xf32>
    %10 = arith.mulf %8, %9 : vector<8x128xf32>
    %cst_6 = arith.constant 4.471500e-02 : f32
    %11 = vector.broadcast %cst_6 : f32 to vector<8x128xf32>
    %12 = arith.mulf %11, %10 : vector<8x128xf32>
    %13 = arith.addf %8, %12 : vector<8x128xf32>
    %cst_7 = arith.constant 0.797884583 : f32
    %14 = vector.broadcast %cst_7 : f32 to vector<8x128xf32>
    %15 = arith.mulf %14, %13 : vector<8x128xf32>
    %16 = math.tanh %15 : vector<8x128xf32>
    %cst_8 = arith.constant 1.000000e+00 : f32
    %17 = vector.broadcast %cst_8 : f32 to vector<8x128xf32>
    %18 = arith.addf %17, %16 : vector<8x128xf32>
    %cst_9 = arith.constant 5.000000e-01 : f32
    %19 = vector.broadcast %cst_9 : f32 to vector<8x128xf32>
    %20 = arith.mulf %19, %18 : vector<8x128xf32>
    %21 = arith.mulf %8, %20 : vector<8x128xf32>
    %c0_10 = arith.constant 0 : index
    %c0_11 = arith.constant 0 : index
    %22 = vector.load %arg11[%c0_10, %c0_11] : memref<8x32xf32, #tpu.memory_space<vmem>>, vector<8x32xf32>
    %c0_12 = arith.constant 0 : index
    %c0_13 = arith.constant 0 : index
    %23 = vector.load %arg7[%c0_12, %c0_13] : memref<128x32xf32, #tpu.memory_space<vmem>>, vector<128x32xf32>
    %cst_14 = arith.constant dense<0.000000e+00> : vector<8x32xf32>
    %24 = tpu.matmul %21, %23, %cst_14 {dimension_numbers = #tpu.dot_dimension_numbers<[1], [0], [0], [1], [0, 0, 1, 1], [], []>} : vector<8x128xf32>, vector<128x32xf32>, vector<8x32xf32> -> vector<8x32xf32>
    %25 = arith.addf %22, %24 : vector<8x32xf32>
    %c0_15 = arith.constant 0 : index
    %c0_16 = arith.constant 0 : index
    %26 = vector.load %arg11[%c0_15, %c0_16] : memref<8x32xf32, #tpu.memory_space<vmem>>, vector<8x32xf32>
    tpu.vector_store %arg11[%c0_15, %c0_16], %25 {strides = array<i32>} : memref<8x32xf32, #tpu.memory_space<vmem>>, vector<8x32xf32>,
    %c1_i32 = arith.constant 1 : i32
    %27 = arith.cmpi eq, %arg1, %c1_i32 : i32
    %28 = arith.extui %27 : i1 to i32
    %c0_i32_17 = arith.constant 0 : i32
    %29 = arith.cmpi ne, %28, %c0_i32_17 : i32
    scf.if %29 {
      %c0_18 = arith.constant 0 : index
      %c0_19 = arith.constant 0 : index
      %30 = vector.load %arg11[%c0_18, %c0_19] : memref<8x32xf32, #tpu.memory_space<vmem>>, vector<8x32xf32>
      %c0_20 = arith.constant 0 : index
      %c0_21 = arith.constant 0 : index
      %31 = vector.load %arg8[%c0_20, %c0_21] : memref<1x32xf32, #tpu.memory_space<vmem>>, vector<1x32xf32>
      %32 = vector.broadcast %31 : vector<1x32xf32> to vector<8x32xf32>
      %33 = arith.addf %30, %32 : vector<8x32xf32>
      %c0_22 = arith.constant 0 : index
      %c0_23 = arith.constant 0 : index
      %34 = vector.load %arg9[%c0_22, %c0_23] : memref<8x32xf32, #tpu.memory_space<vmem>>, vector<8x32xf32>
      tpu.vector_store %arg9[%c0_22, %c0_23], %33 {strides = array<i32>} : memref<8x32xf32, #tpu.memory_space<vmem>>, vector<8x32xf32>,
    } else {
    }
    return
  }
  func.func @transform_0(%arg0: i32, %arg1: i32) -> (i32, i32) {
    %c0_i32 = arith.constant 0 : i32
    %c0_i32_0 = arith.constant 0 : i32
    return %arg0, %c0_i32 : i32, i32
  }
  func.func @transform_1(%arg0: i32, %arg1: i32) -> (i32, i32) {
    %c0_i32 = arith.constant 0 : i32
    %c0_i32_0 = arith.constant 0 : i32
    %c0_i32_1 = arith.constant 0 : i32
    return %c0_i32, %c0_i32_0 : i32, i32
  }
  func.func @transform_2(%arg0: i32, %arg1: i32) -> (i32, i32) {
    %c0_i32 = arith.constant 0 : i32
    %c0_i32_0 = arith.constant 0 : i32
    %c0_i32_1 = arith.constant 0 : i32
    return %c0_i32, %c0_i32_0 : i32, i32
  }
  func.func @transform_3(%arg0: i32, %arg1: i32) -> (i32, i32) {
    %c0_i32 = arith.constant 0 : i32
    %c0_i32_0 = arith.constant 0 : i32
    return %c0_i32, %arg1 : i32, i32
  }
  func.func @transform_4(%arg0: i32, %arg1: i32) -> (i32, i32) {
    %c0_i32 = arith.constant 0 : i32
    %c0_i32_0 = arith.constant 0 : i32
    return %c0_i32, %arg1 : i32, i32
  }
  func.func @transform_5(%arg0: i32, %arg1: i32) -> (i32, i32) {
    %c0_i32 = arith.constant 0 : i32
    %c0_i32_0 = arith.constant 0 : i32
    return %arg1, %c0_i32 : i32, i32
  }
  func.func @transform_6(%arg0: i32, %arg1: i32) -> (i32, i32) {
    %c0_i32 = arith.constant 0 : i32
    %c0_i32_0 = arith.constant 0 : i32
    %c0_i32_1 = arith.constant 0 : i32
    return %c0_i32, %c0_i32_0 : i32, i32
  }
  func.func @transform_7(%arg0: i32, %arg1: i32) -> (i32, i32) {
    %c0_i32 = arith.constant 0 : i32
    %c0_i32_0 = arith.constant 0 : i32
    return %arg0, %c0_i32 : i32, i32
  }
}

</mosaic_0001>

<llo_original>
// kernel: tpu_custom_call.1
$region0: #{tpu_custom_call.1}
  #allocation0 [shape = 'u32[]', space=smem, size = 0x4, offset = 0x4, fixed_abs, tag = 'smem constant byte address 0x4 - core index']
  #allocation1 [shape = 'u32[72,128]{1,0:T(1,128)}', space=vmem, size = 0x9000, scoped, tag = 'internal scratch']
  #allocation2 [shape = 'f32[8,32]{1,0:T(8,128)}', space=vmem, size = 0x1000, scoped, tag = 'scratch operand']
  #allocation3 [shape = 'f32[8,32]{1,0:T(8,128)}', space=vmem, size = 0x1000, scoped, tag = 'scratch operand']
  %s0 = inlined_call_operand.vmem [shape: f32[16,32], index: 0, kind: input, shape index: {}]
  %s1 = inlined_call_operand.vmem [shape: f32[1,32], index: 1, kind: input, shape index: {}]
  %s2 = inlined_call_operand.vmem [shape: f32[1,32], index: 2, kind: input, shape index: {}]
  %s3 = inlined_call_operand.vmem [shape: f32[32,256], index: 3, kind: input, shape index: {}]
  %s4 = inlined_call_operand.vmem [shape: f32[1,256], index: 4, kind: input, shape index: {}]
  %s5 = inlined_call_operand.vmem [shape: f32[256,32], index: 5, kind: input, shape index: {}]
  %s6 = inlined_call_operand.vmem [shape: f32[1,32], index: 6, kind: input, shape index: {}]
  %s7 = inlined_call_operand.hbm [shape: f32[16,32], index: 7, kind: output, shape index: {}]
  %s8 = sld [smem:[#allocation0]]
  $region107: #{tpu_custom_call.1} parent=0
    _
  %s10 = ssub.s32 1, %s8
  %s11 = scalar_select 0, %s10, %s8
  $region1: #{tpu_custom_call.1} parent=0
    #allocation4 [shape = 'u8[32768]{0}', space=vmem, size = 0x8000, scoped, tag = 'input window, operand 3']
    #allocation5 [shape = 'u8[8192]{0}', space=vmem, size = 0x2000, scoped, tag = 'output window, operand 0']
    #allocation6 [shape = 's32[2]{0}', space=sflag, size = 0x8, scoped, tag = 'scoped memory for tpu_custom_call.1']
    %12 = vsyncpa [#allocation6], 0
    %s13 = scalar_lea.sflag [#allocation6], 1
    %14 = vsyncpa %s13, 0
    loop: start=0, step=1, limit=6
    $region2: #{tpu_custom_call.1} parent=1 // loop_pre_header
      _
    $region3: #{tpu_custom_call.1} parent=1 // loop_header
      %s16 = sphi 0, %s20
      %p17 = scmp.ge.s32.totalorder %s16, 6
      %s23 = sphi 0, %s35
      %s24 = sphi 0, %s31
      %s25 = sphi 0, %s23
      %s26 = sphi 0, %s24
      %s27 = sphi 0, %s25
      %s28 = sphi 0, %s26
      %s38 = sphi 0, %s40
      %s41 = sphi 0, %s38
      %s42 = sphi 0, %s41
      %s58 = sphi 0, %s42
      %s62 = sphi 0, %s62
      %s64 = sphi 0, %s62
      %s65 = sphi 0, %s64
      %s79 = sphi 0, %s65
      %s83 = sphi 0, %s83
      %s85 = sphi 0, %s83
      %s86 = sphi 0, %s85
      %s100 = sphi 0, %s86
      %s106 = sphi 0, %s108
      %s109 = sphi 0, %s106
      %s110 = sphi 0, %s109
      %s126 = sphi 0, %s110
      %s132 = sphi 0, %s134
      %s135 = sphi 0, %s132
      %s136 = sphi 0, %s135
      %s152 = sphi 0, %s136
      %s158 = sphi 0, %s160
      %s161 = sphi 0, %s158
      %s162 = sphi 0, %s161
      %s178 = sphi 0, %s162
      %s182 = sphi 0, %s182
      %s184 = sphi 0, %s182
      %s185 = sphi 0, %s184
      %s199 = sphi 0, %s185
      %s205 = sphi 0, %s207
      %s208 = sphi 0, %s205
      %s209 = sphi 0, %s208
      %s225 = sphi 0, %s209
    $region4: #{tpu_custom_call.1} parent=1 // loop_header_branch
      %19 = sbr.rel (%p17) target = $region8
    $region5: #{tpu_custom_call.1} parent=1 // loop_body
      %s21 = ssub.s32 %s16, 1
      %s22 = ssub.s32 %s16, 2
      %s29 = sadd.s32 1, %s24
      %p30 = scmp.ge.s32.totalorder %s29, 2
      %s31 = scalar_select %p30, 0, %s29
      %s32 = sadd.s32 1, %s23
      %s33 = scalar_select %p30, %s32, %s23
      %p34 = scmp.ge.s32.totalorder %s33, 2
      %s35 = scalar_select %p34, 0, %s33
      %s36 = ssub.s32 %s23, %s35
      %p37 = scmp.eq.s32.totalorder %s36, 0
      %s39 = sadd.s32 %s38, 1
      %s40 = scalar_select %p37, %s38, %s39
      %p43 = pneg %p37
      %p44 = scmp.eq.s32.totalorder %s16, 3
      %p45 = por %p43, %p44
      %p46 = scmp.ne.s32.totalorder %s38, %s41
      %p47 = scmp.eq.s32.totalorder %s16, 0
      %p48 = por %p46, %p47
      %p49 = scmp.ne.s32.totalorder %s38, %s41
      %p50 = scmp.eq.s32.totalorder %s21, 3
      %p51 = por %p49, %p50
      %p52 = scmp.ne.s32.totalorder %s41, %s42
      %p53 = scmp.eq.s32.totalorder %s21, 0
      %p54 = por %p52, %p53
      %p55 = scmp.ne.s32.totalorder %s41, %s42
      %p56 = scmp.eq.s32.totalorder %s22, 3
      %p57 = por %p55, %p56
      %p59 = scmp.ne.s32.totalorder %s42, %s58
      %p60 = scmp.eq.s32.totalorder %s22, 0
      %p61 = por %p59, %p60
      %s63 = sadd.s32 %s62, 1
      %p66 = scmp.eq.s32.totalorder %s16, 3
      %p67 = scmp.ne.s32.totalorder %s62, %s64
      %p68 = scmp.eq.s32.totalorder %s16, 0
      %p69 = por %p67, %p68
      %p70 = scmp.ne.s32.totalorder %s62, %s64
      %p71 = scmp.eq.s32.totalorder %s21, 3
      %p72 = por %p70, %p71
      %p73 = scmp.ne.s32.totalorder %s64, %s65
      %p74 = scmp.eq.s32.totalorder %s21, 0
      %p75 = por %p73, %p74
      %p76 = scmp.ne.s32.totalorder %s64, %s65
      %p77 = scmp.eq.s32.totalorder %s22, 3
      %p78 = por %p76, %p77
      %p80 = scmp.ne.s32.totalorder %s65, %s79
      %p81 = scmp.eq.s32.totalorder %s22, 0
      %p82 = por %p80, %p81
      %s84 = sadd.s32 %s83, 1
      %p87 = scmp.eq.s32.totalorder %s16, 3
      %p88 = scmp.ne.s32.totalorder %s83, %s85
      %p89 = scmp.eq.s32.totalorder %s16, 0
      %p90 = por %p88, %p89
      %p91 = scmp.ne.s32.totalorder %s83, %s85
      %p92 = scmp.eq.s32.totalorder %s21, 3
      %p93 = por %p91, %p92
      %p94 = scmp.ne.s32.totalorder %s85, %s86
      %p95 = scmp.eq.s32.totalorder %s21, 0
      %p96 = por %p94, %p95
      %p97 = scmp.ne.s32.totalorder %s85, %s86
      %p98 = scmp.eq.s32.totalorder %s22, 3
      %p99 = por %p97, %p98
      %p101 = scmp.ne.s32.totalorder %s86, %s100
      %p102 = scmp.eq.s32.totalorder %s22, 0
      %p103 = por %p101, %p102
      %s104 = ssub.s32 %s24, %s31
      %p105 = scmp.eq.s32.totalorder %s104, 0
      %s107 = sadd.s32 %s106, 1
      %s108 = scalar_select %p105, %s106, %s107
      %p111 = pneg %p105
      %p112 = scmp.eq.s32.totalorder %s16, 3
      %p113 = por %p111, %p112
      %p114 = scmp.ne.s32.totalorder %s106, %s109
      %p115 = scmp.eq.s32.totalorder %s16, 0
      %p116 = por %p114, %p115
      %p117 = scmp.ne.s32.totalorder %s106, %s109
      %p118 = scmp.eq.s32.totalorder %s21, 3
      %p119 = por %p117, %p118
      %p120 = scmp.ne.s32.totalorder %s109, %s110
      %p121 = scmp.eq.s32.totalorder %s21, 0
      %p122 = por %p120, %p121
      %p123 = scmp.ne.s32.totalorder %s109, %s110
      %p124 = scmp.eq.s32.totalorder %s22, 3
      %p125 = por %p123, %p124
      %p127 = scmp.ne.s32.totalorder %s110, %s126
      %p128 = scmp.eq.s32.totalorder %s22, 0
      %p129 = por %p127, %p128
      %s130 = ssub.s32 %s24, %s31
      %p131 = scmp.eq.s32.totalorder %s130, 0
      %s133 = sadd.s32 %s132, 1
      %s134 = scalar_select %p131, %s132, %s133
      %p137 = pneg %p131
      %p138 = scmp.eq.s32.totalorder %s16, 3
      %p139 = por %p137, %p138
      %p140 = scmp.ne.s32.totalorder %s132, %s135
      %p141 = scmp.eq.s32.totalorder %s16, 0
      %p142 = por %p140, %p141
      %p143 = scmp.ne.s32.totalorder %s132, %s135
      %p144 = scmp.eq.s32.totalorder %s21, 3
      %p145 = por %p143, %p144
      %p146 = scmp.ne.s32.totalorder %s135, %s136
      %p147 = scmp.eq.s32.totalorder %s21, 0
      %p148 = por %p146, %p147
      %p149 = scmp.ne.s32.totalorder %s135, %s136
      %p150 = scmp.eq.s32.totalorder %s22, 3
      %p151 = por %p149, %p150
      %p153 = scmp.ne.s32.totalorder %s136, %s152
      %p154 = scmp.eq.s32.totalorder %s22, 0
      %p155 = por %p153, %p154
      %s156 = ssub.s32 %s24, %s31
      %p157 = scmp.eq.s32.totalorder %s156, 0
      %s159 = sadd.s32 %s158, 1
      %s160 = scalar_select %p157, %s158, %s159
      %p163 = pneg %p157
      %p164 = scmp.eq.s32.totalorder %s16, 3
      %p165 = por %p163, %p164
      %p166 = scmp.ne.s32.totalorder %s158, %s161
      %p167 = scmp.eq.s32.totalorder %s16, 0
      %p168 = por %p166, %p167
      %p169 = scmp.ne.s32.totalorder %s158, %s161
      %p170 = scmp.eq.s32.totalorder %s21, 3
      %p171 = por %p169, %p170
      %p172 = scmp.ne.s32.totalorder %s161, %s162
      %p173 = scmp.eq.s32.totalorder %s21, 0
      %p174 = por %p172, %p173
      %p175 = scmp.ne.s32.totalorder %s161, %s162
      %p176 = scmp.eq.s32.totalorder %s22, 3
      %p177 = por %p175, %p176
      %p179 = scmp.ne.s32.totalorder %s162, %s178
      %p180 = scmp.eq.s32.totalorder %s22, 0
      %p181 = por %p179, %p180
      %s183 = sadd.s32 %s182, 1
      %p186 = scmp.eq.s32.totalorder %s16, 3
      %p187 = scmp.ne.s32.totalorder %s182, %s184
      %p188 = scmp.eq.s32.totalorder %s16, 0
      %p189 = por %p187, %p188
      %p190 = scmp.ne.s32.totalorder %s182, %s184
      %p191 = scmp.eq.s32.totalorder %s21, 3
      %p192 = por %p190, %p191
      %p193 = scmp.ne.s32.totalorder %s184, %s185
      %p194 = scmp.eq.s32.totalorder %s21, 0
      %p195 = por %p193, %p194
      %p196 = scmp.ne.s32.totalorder %s184, %s185
      %p197 = scmp.eq.s32.totalorder %s22, 3
      %p198 = por %p196, %p197
      %p200 = scmp.ne.s32.totalorder %s185, %s199
      %p201 = scmp.eq.s32.totalorder %s22, 0
      %p202 = por %p200, %p201
      %s203 = ssub.s32 %s23, %s35
      %p204 = scmp.eq.s32.totalorder %s203, 0
      %s206 = sadd.s32 %s205, 1
      %s207 = scalar_select %p204, %s205, %s206
      %p210 = pneg %p204
      %p211 = scmp.eq.s32.totalorder %s16, 3
      %p212 = por %p210, %p211
      %p213 = scmp.ne.s32.totalorder %s205, %s208
      %p214 = scmp.eq.s32.totalorder %s16, 0
      %p215 = por %p213, %p214
      %p216 = scmp.ne.s32.totalorder %s205, %s208
      %p217 = scmp.eq.s32.totalorder %s21, 3
      %p218 = por %p216, %p217
      %p219 = scmp.ne.s32.totalorder %s208, %s209
      %p220 = scmp.eq.s32.totalorder %s21, 0
      %p221 = por %p219, %p220
      %p222 = scmp.ne.s32.totalorder %s208, %s209
      %p223 = scmp.eq.s32.totalorder %s22, 3
      %p224 = por %p222, %p223
      %p226 = scmp.ne.s32.totalorder %s209, %s225
      %p227 = scmp.eq.s32.totalorder %s22, 0
      %p228 = por %p226, %p227
      %p229 = scmp.le.s32.totalorder 1, %s16
      %p230 = scmp.lt.s32.totalorder %s16, 5
      %p231 = pnand %p229, %p230
      %p232 = pneg %p231
      // Predicated region
      $region9: #{tpu_custom_call.1} parent=5 // pred_check
        _
      $region10: #{tpu_custom_call.1} parent=5 // pred_check_branch
        %234 = sbr.rel (%p231) target = $region12
      $region11: #{tpu_custom_call.1} parent=5 // pred_region
        %s235 = ssub.s32 %s16, 1
        // Predicated region
        $region13: #{tpu_custom_call.1} parent=11 // pred_check
          %p236 = pneg %p75
        $region14: #{tpu_custom_call.1} parent=11 // pred_check_branch
          %238 = sbr.rel (%p236) target = $region16
        $region15: #{tpu_custom_call.1} parent=11 // pred_region
          _
        $region16: #{tpu_custom_call.1} parent=11 // pred_fallthru
          _
        // Predicated region
        $region17: #{tpu_custom_call.1} parent=11 // pred_check
          %p239 = pneg %p96
        $region18: #{tpu_custom_call.1} parent=11 // pred_check_branch
          %241 = sbr.rel (%p239) target = $region20
        $region19: #{tpu_custom_call.1} parent=11 // pred_region
          _
        $region20: #{tpu_custom_call.1} parent=11 // pred_fallthru
          _
        // Predicated region
        $region21: #{tpu_custom_call.1} parent=11 // pred_check
          %p242 = pneg %p195
        $region22: #{tpu_custom_call.1} parent=11 // pred_check_branch
          %244 = sbr.rel (%p242) target = $region24
        $region23: #{tpu_custom_call.1} parent=11 // pred_region
          _
        $region24: #{tpu_custom_call.1} parent=11 // pred_fallthru
          _
      $region12: #{tpu_custom_call.1} parent=5 // pred_fallthru
        _
      %p245 = scmp.lt.s32.totalorder %s16, 4
      // Predicated region
      $region25: #{tpu_custom_call.1} parent=5 // pred_check
        %p246 = pneg %p245
      $region26: #{tpu_custom_call.1} parent=5 // pred_check_branch
        %248 = sbr.rel (%p246) target = $region28
      $region27: #{tpu_custom_call.1} parent=5 // pred_region
        // Predicated region
        $region29: #{tpu_custom_call.1} parent=27 // pred_check
          %p249 = pneg %p48
        $region30: #{tpu_custom_call.1} parent=27 // pred_check_branch
          %251 = sbr.rel (%p249) target = $region32
        $region31: #{tpu_custom_call.1} parent=27 // pred_region
          %p252 = scmp.lt.s32.totalorder %s23, 1
          %s253 = scalar_select %p252, %s23, 1
          %s254 = smul.addr %s253, 8
          %s255 = scalar_lea.vmem %s0, %s254
        $region32: #{tpu_custom_call.1} parent=27 // pred_fallthru
          _
        // Predicated region
        $region33: #{tpu_custom_call.1} parent=27 // pred_check
          %p256 = pneg %p116
        $region34: #{tpu_custom_call.1} parent=27 // pred_check_branch
          %258 = sbr.rel (%p256) target = $region36
        $region35: #{tpu_custom_call.1} parent=27 // pred_region
          %s259 = sand.u32 %s106, 1
          %s260 = sand.u32 %s106, 1
          %s261 = smul.addr %s260, 32
          %s262 = scalar_lea.vmem [#allocation4], %s261
          %s263 = smul.addr %s24, 8
          %s264 = scalar_lea.vmem %s3, %s263
          // Predicated region
          $region37: #{tpu_custom_call.1} parent=35 // pred_check
            _
          $region38: #{tpu_custom_call.1} parent=35 // pred_check_branch
            %266 = sbr.rel (0) target = $region40
          $region39: #{tpu_custom_call.1} parent=35 // pred_region
            // Predicated region
            $region41: #{tpu_custom_call.1} parent=39 // pred_check
              _
            $region42: #{tpu_custom_call.1} parent=39 // pred_check_branch
              %268 = sbr.rel (0) target = $region44
            $region43: #{tpu_custom_call.1} parent=39 // pred_region
              // Predicated region
              $region56: #{tpu_custom_call.1} parent=43 // pred_check
                _
              $region57: #{tpu_custom_call.1} parent=43 // pred_check_branch
                %290 = sbr.rel (0) target = $region59
              $region58: #{tpu_custom_call.1} parent=43 // pred_region
                loop: start=0, step=1, limit=1
                $region60: #{tpu_custom_call.1} parent=58 // loop_pre_header
                  _
                $region61: #{tpu_custom_call.1} parent=58 // loop_header
                  %s292 = sphi 0, %s296
                  %p293 = scmp.ge.s32.totalorder %s292, 1
                  %s297 = sphi %s264, %s264
                  %s298 = sphi %s262, %s262
                $region62: #{tpu_custom_call.1} parent=58 // loop_header_branch
                  %295 = sbr.rel (%p293) target = $region66
                $region63: #{tpu_custom_call.1} parent=58 // loop_body
                  %v299 = vld [vmem:[%s297] sm:$0xff]
                  %300 = vst [vmem:[%s298] sm:$0xff] %v299
                  %v301 = vld [vmem:[%s297 + $0x10] sm:$0xff]
                  %302 = vst [vmem:[%s298 + $0x8] sm:$0xff] %v301
                  %v303 = vld [vmem:[%s297 + $0x20] sm:$0xff]
                  %304 = vst [vmem:[%s298 + $0x10] sm:$0xff] %v303
                  %v305 = vld [vmem:[%s297 + $0x30] sm:$0xff]
                  %306 = vst [vmem:[%s298 + $0x18] sm:$0xff] %v305
                $region64: #{tpu_custom_call.1} parent=58 // loop_footer
                  %s296 = sadd.s32 1, %s292
                $region65: #{tpu_custom_call.1} parent=58 // loop_footer_branch
                  %291 = sbr.rel target = $region61
                $region66: #{tpu_custom_call.1} parent=58 // loop_exit
                  _
              $region59: #{tpu_custom_call.1} parent=43 // pred_fallthru
                _
              // Predicated region
              $region67: #{tpu_custom_call.1} parent=43 // pred_check
                _
              $region68: #{tpu_custom_call.1} parent=43 // pred_check_branch
                %308 = sbr.rel target = $region70
              $region69: #{tpu_custom_call.1} parent=43 // pred_region
                _
              $region70: #{tpu_custom_call.1} parent=43 // pred_fallthru
                _
            $region44: #{tpu_custom_call.1} parent=39 // pred_fallthru
              _
            // Predicated region
            $region45: #{tpu_custom_call.1} parent=39 // pred_check
              _
            $region46: #{tpu_custom_call.1} parent=39 // pred_check_branch
              %270 = sbr.rel target = $region48
            $region47: #{tpu_custom_call.1} parent=39 // pred_region
              %s272 = ssub.s32 256, 1
              loop: start=0, step=1, limit=1
              $region49: #{tpu_custom_call.1} parent=47 // loop_pre_header
                _
              $region50: #{tpu_custom_call.1} parent=47 // loop_header
                %s274 = sphi 0, %s278
                %p275 = scmp.ge.s32.totalorder %s274, 1
                %s279 = sphi %s264, %s264
                %s280 = sphi %s262, %s262
              $region51: #{tpu_custom_call.1} parent=47 // loop_header_branch
                %277 = sbr.rel (%p275) target = $region55
              $region52: #{tpu_custom_call.1} parent=47 // loop_body
                %v281 = vld [vmem:[%s279] sm:%s272]
                %282 = vst [vmem:[%s280] sm:%s272] %v281
                %v283 = vld [vmem:[%s279 + $0x10] sm:%s272]
                %284 = vst [vmem:[%s280 + $0x8] sm:%s272] %v283
                %v285 = vld [vmem:[%s279 + $0x20] sm:%s272]
                %286 = vst [vmem:[%s280 + $0x10] sm:%s272] %v285
                %v287 = vld [vmem:[%s279 + $0x30] sm:%s272]
                %288 = vst [vmem:[%s280 + $0x18] sm:%s272] %v287
              $region53: #{tpu_custom_call.1} parent=47 // loop_footer
                %s278 = sadd.s32 1, %s274
              $region54: #{tpu_custom_call.1} parent=47 // loop_footer_branch
                %273 = sbr.rel target = $region50
              $region55: #{tpu_custom_call.1} parent=47 // loop_exit
                _
            $region48: #{tpu_custom_call.1} parent=39 // pred_fallthru
              _
          $region40: #{tpu_custom_call.1} parent=35 // pred_fallthru
            _
          %309 = vnop
        $region36: #{tpu_custom_call.1} parent=27 // pred_fallthru
          _
        // Predicated region
        $region71: #{tpu_custom_call.1} parent=27 // pred_check
          %p310 = pneg %p142
        $region72: #{tpu_custom_call.1} parent=27 // pred_check_branch
          %312 = sbr.rel (%p310) target = $region74
        $region73: #{tpu_custom_call.1} parent=27 // pred_region
          %p313 = scmp.lt.s32.totalorder %s24, 1
          %s314 = scalar_select %p313, %s24, 1
          %s315 = scalar_lea.vmem %s4, %s314
        $region74: #{tpu_custom_call.1} parent=27 // pred_fallthru
          _
        // Predicated region
        $region75: #{tpu_custom_call.1} parent=27 // pred_check
          %p316 = pneg %p168
        $region76: #{tpu_custom_call.1} parent=27 // pred_check_branch
          %318 = sbr.rel (%p316) target = $region78
        $region77: #{tpu_custom_call.1} parent=27 // pred_region
          %s319 = smul.u32 16, %s24
          %p320 = scmp.lt.s32.totalorder %s319, 31
          %s321 = scalar_select %p320, %s319, 31
          %s322 = smul.addr %s321, 8
          %s323 = scalar_lea.vmem %s5, %s322
          %s324 = smul.u32 16, %s24
        $region78: #{tpu_custom_call.1} parent=27 // pred_fallthru
          _
      $region28: #{tpu_custom_call.1} parent=5 // pred_fallthru
        _
      %p325 = scmp.le.s32.totalorder 1, %s16
      %p326 = scmp.lt.s32.totalorder %s16, 5
      %p327 = pnand %p325, %p326
      %p328 = pneg %p327
      // Predicated region
      $region79: #{tpu_custom_call.1} parent=5 // pred_check
        _
      $region80: #{tpu_custom_call.1} parent=5 // pred_check_branch
        %330 = sbr.rel (%p327) target = $region82
      $region81: #{tpu_custom_call.1} parent=5 // pred_region
        %s331 = ssub.s32 %s16, 1
        %s332 = sand.u32 %s109, 1
        %s333 = sand.u32 %s109, 1
        %s334 = smul.addr %s333, 32
        %s335 = scalar_lea.vmem [#allocation4], %s334
        // Predicated region
        $region83: #{tpu_custom_call.1} parent=81 // pred_check
          %p336 = pneg %p122
        $region84: #{tpu_custom_call.1} parent=81 // pred_check_branch
          %338 = sbr.rel (%p336) target = $region86
        $region85: #{tpu_custom_call.1} parent=81 // pred_region
          _
        $region86: #{tpu_custom_call.1} parent=81 // pred_fallthru
          _
        %p339 = scmp.lt.s32.totalorder %s25, 1
        %s340 = scalar_select %p339, %s25, 1
        %s341 = smul.addr %s340, 8
        %s342 = scalar_lea.vmem %s0, %s341
        %p343 = pneg %p54
        %p344 = pneg %p51
        %p345 = pneg %p75
        %p346 = pneg %p72
        %p347 = pneg %p96
        %p348 = pneg %p93
        %s349 = sand.u32 %s109, 1
        %s350 = sand.u32 %s109, 1
        %s351 = smul.addr %s350, 32
        %s352 = scalar_lea.vmem [#allocation4], %s351
        %p353 = pneg %p122
        %p354 = pneg %p119
        %p355 = scmp.lt.s32.totalorder %s26, 1
        %s356 = scalar_select %p355, %s26, 1
        %s357 = scalar_lea.vmem %s4, %s356
        %p358 = pneg %p148
        %p359 = pneg %p145
        %s360 = smul.u32 16, %s26
        %p361 = scmp.lt.s32.totalorder %s360, 31
        %s362 = scalar_select %p361, %s360, 31
        %s363 = smul.addr %s362, 8
        %s364 = scalar_lea.vmem %s5, %s363
        %p365 = pneg %p174
        %p366 = pneg %p171
        %p367 = pneg %p195
        %p368 = pneg %p192
        %p369 = pneg %p221
        %p370 = pneg %p218
        %s371 = sand.u32 %s208, 1
        %s372 = scalar_lea.sflag [#allocation6], %s371
        %s373 = sand.u32 %s208, 1
        %s374 = smul.addr %s373, 8
        %s375 = scalar_lea.vmem [#allocation5], %s374
        %p376 = scmp.lt.s32.totalorder %s25, 1
        %s377 = scalar_select %p376, %s25, 1
        %s378 = smul.addr %s377, 8
        %s379 = scalar_lea.vmem %s0, %s378
        %p380 = scmp.lt.s32.totalorder %s26, 1
        %s381 = scalar_select %p380, %s26, 1
        %s382 = scalar_lea.vmem %s4, %s381
        %s383 = smul.u32 16, %s26
        %p384 = scmp.lt.s32.totalorder %s383, 31
        %s385 = scalar_select %p384, %s383, 31
        %s386 = smul.addr %s385, 8
        %s387 = scalar_lea.vmem %s5, %s386
        %s388 = smul.u32 16, %s26
        %p389 = scmp.eq.s32.totalorder %s26, 0
        // Predicated region
        $region87: #{tpu_custom_call.1} parent=81 // pred_check
          %p390 = pneg %p389
        $region88: #{tpu_custom_call.1} parent=81 // pred_check_branch
          %392 = sbr.rel (%p390) target = $region90
        $region89: #{tpu_custom_call.1} parent=81 // pred_region
          %v393 = vld [vmem:[%s379] sm:$0xff]
          %vm394 = vcmask 261120
          %v395 = vsel %vm394, %v393, 0.0
          %396 = vadd.xlane.f32.xlu0 %v395
          %v397 = vpop.xlane.xlu0 %396
          %v398 = vrcp.pop 32.0
          %v399 = vmul.f32 32.0, %v398
          %v400 = vsub.f32 1.0, %v399
          %v401 = vmul.f32 %v398, %v400
          %v402 = vadd.f32 %v398, %v401
          %vm403 = vweird.f32 %v398
          %v404 = vsel %vm403, %v398, %v402
          %v405 = vmul.f32 %v397, %v404
          %v406 = vsub.f32 %v393, %v405
          %v407 = vmul.f32 %v406, %v406
          %v408 = vsel %vm394, %v407, 0.0
          %409 = vadd.xlane.f32.xlu0 %v408
          %v410 = vpop.xlane.xlu0 %409
          %v411 = vmul.f32 %v410, %v404
          %v412 = vadd.f32 %v411, 1e-05
          %v413 = vrsqrt.pop %v412
          %v414 = vmul.f32 %v413, %v412
          %v415 = vmul.f32 %v414, %v413
          %v416 = vmul.f32 0.5, %v415
          %v417 = vsub.f32 1.5, %v416
          %v418 = vmul.f32 %v413, %v417
          %vm419 = vweird.f32 %v412
          %vm420 = vweird.f32 %v413
          %vm421 = vmor %vm419, %vm420
          %v422 = vsel %vm421, %v413, %v418
          %v423 = vmul.f32 %v406, %v422
          %v424 = vld [vmem:[%s1] sm:$0x1]
          %v426 = vperm.slane %v424, 0
          %v428 = vmul.f32 %v423, %v426
          %v429 = vld [vmem:[%s2] sm:$0x1]
          %v431 = vperm.slane %v429, 0
          %v433 = vadd.f32 %v428, %v431
          %434 = vst.msk [vmem:[#allocation2] sm:$0xff] %vm394, %v433
          %435 = vst.msk [vmem:[#allocation3] sm:$0xff] %vm394, 0.0
        $region90: #{tpu_custom_call.1} parent=81 // pred_fallthru
          _
        %v436 = vld [vmem:[#allocation2] sm:$0xff]
        %v437 = vld [vmem:[%s335] sm:$0xff]
        %v438 = vld [vmem:[%s335 + $0x8] sm:$0xff]
        %v439 = vld [vmem:[%s335 + $0x10] sm:$0xff]
        %v440 = vld [vmem:[%s335 + $0x18] sm:$0xff]
        %v441 = vld [vmem:[%s382] sm:$0x1]
        %v443 = vperm.slane %v441, 0
        %vm445 = vcmask 261120
        %v447 = vsel %vm445, %v436, 0
        %449 = vmatpush.msra.mxu0 0.0
        %450 = vmatpush.msra.mxu0 0.0
        %451 = vmatpush.msra.mxu0 0.0
        %452 = vmatpush.msra.mxu0 0.0
        %453 = vmatpush.msra.mxu0 0.0
        %454 = vmatpush.msra.mxu0 0.0
        %455 = vmatpush.msra.mxu0 0.0
        %456 = vmatpush.msra.mxu0 0.0
        %457 = vmatpush.msra.mxu0 0.0
        %458 = vmatpush.msra.mxu0 0.0
        %459 = vmatpush.msra.mxu0 0.0
        %460 = vmatpush.msra.mxu0 0.0
        %461 = vmatpush.msra.mxu0 %v440
        %462 = vmatpush.msra.mxu0 %v439
        %463 = vmatpush.msra.mxu0 %v438
        %464 = vmatpush.msra.mxu0 %v437
        %465 = vmatmul.f32.gmra.mxu0 %v447
        %v466 = vpop.f32.mrf.mxu0
        %v467 = vadd.f32 %v443, %v466
        %468 = vdwg.mxu0
        %v469 = vmul.f32 %v467, %v467
        %v470 = vmul.f32 %v467, %v469
        %v471 = vmul.f32 %v470, 0.044715
        %v472 = vadd.f32 %v467, %v471
        %v473 = vmul.f32 %v472, 0.7978846
        %v474 = vtanh.pop %v473
        %v475 = vadd.f32 %v474, 1.0
        %v476 = vmul.f32 %v475, 0.5
        %v477 = vmul.f32 %v467, %v476
        %v478 = vld [vmem:[#allocation3] sm:$0xff]
        %v479 = vld [vmem:[%s387] sm:$0xff]
        %v480 = vld [vmem:[%s387 + $0x8] sm:$0xff]
        %v481 = vld [vmem:[%s387 + $0x10] sm:$0xff]
        %v482 = vld [vmem:[%s387 + $0x18] sm:$0xff]
        %v483 = vld [vmem:[%s387 + $0x20] sm:$0xff]
        %v484 = vld [vmem:[%s387 + $0x28] sm:$0xff]
        %v485 = vld [vmem:[%s387 + $0x30] sm:$0xff]
        %v486 = vld [vmem:[%s387 + $0x38] sm:$0xff]
        %v487 = vld [vmem:[%s387 + $0x40] sm:$0xff]
        %v488 = vld [vmem:[%s387 + $0x48] sm:$0xff]
        %v489 = vld [vmem:[%s387 + $0x50] sm:$0xff]
        %v490 = vld [vmem:[%s387 + $0x58] sm:$0xff]
        %v491 = vld [vmem:[%s387 + $0x60] sm:$0xff]
        %v492 = vld [vmem:[%s387 + $0x68] sm:$0xff]
        %v493 = vld [vmem:[%s387 + $0x70] sm:$0xff]
        %v494 = vld [vmem:[%s387 + $0x78] sm:$0xff]
        %495 = vmatpush.msra.mxu0 %v494
        %496 = vmatpush.msra.mxu0 %v493
        %497 = vmatpush.msra.mxu0 %v492
        %498 = vmatpush.msra.mxu0 %v491
        %499 = vmatpush.msra.mxu0 %v490
        %500 = vmatpush.msra.mxu0 %v489
        %501 = vmatpush.msra.mxu0 %v488
        %502 = vmatpush.msra.mxu0 %v487
        %503 = vmatpush.msra.mxu0 %v486
        %504 = vmatpush.msra.mxu0 %v485
        %505 = vmatpush.msra.mxu0 %v484
        %506 = vmatpush.msra.mxu0 %v483
        %507 = vmatpush.msra.mxu0 %v482
        %508 = vmatpush.msra.mxu0 %v481
        %509 = vmatpush.msra.mxu0 %v480
        %510 = vmatpush.msra.mxu0 %v479
        %511 = vmatmul.f32.gmra.mxu0 %v477
        %v512 = vpop.f32.mrf.mxu0
        %v513 = vadd.f32 0.0, %v512
        %514 = vdwg.mxu0
        %v515 = vadd.f32 %v478, %v513
        %516 = vst.msk [vmem:[#allocation3] sm:$0xff] %vm445, %v515
        %p517 = scmp.eq.s32.totalorder %s26, 1
        // Predicated region
        $region91: #{tpu_custom_call.1} parent=81 // pred_check
          %p518 = pneg %p517
        $region92: #{tpu_custom_call.1} parent=81 // pred_check_branch
          %520 = sbr.rel (%p518) target = $region94
        $region93: #{tpu_custom_call.1} parent=81 // pred_region
          %v521 = vld [vmem:[#allocation3] sm:$0xff]
          %v522 = vld [vmem:[%s6] sm:$0x1]
          %v524 = vperm.slane %v522, 0
          %v526 = vadd.f32 %v521, %v524
          %527 = vst.msk [vmem:[%s375] sm:$0xff] %vm445, %v526
        $region94: #{tpu_custom_call.1} parent=81 // pred_fallthru
          _
        %s528 = sand.u32 %s208, 1
        %s529 = scalar_lea.sflag [#allocation6], %s528
        %s530 = sand.u32 %s208, 1
        %s531 = smul.addr %s530, 8
        %s532 = scalar_lea.vmem [#allocation5], %s531
        // Predicated region
        $region95: #{tpu_custom_call.1} parent=81 // pred_check
          %p533 = pneg %p218
        $region96: #{tpu_custom_call.1} parent=81 // pred_check_branch
          %535 = sbr.rel (%p533) target = $region98
        $region97: #{tpu_custom_call.1} parent=81 // pred_region
          %537 = vsyncadd %s529, 0
          %s538 = smul.addr %s25, 8
          %s539 = scalar_lea.hbm %s7, %s538
          %s541 = sshll.u32 %s532, 4
          %s542 = int_to_ptr.vmem [resolvable:$true] %s541
          %s543 = sshll.u32 %s539, 4
          %s544 = int_to_ptr.hbm [resolvable:$true] %s543
          %546 = dma.vmem_to_hbm [thread:$0]  %s542, 128, %s544, %s529
        $region98: #{tpu_custom_call.1} parent=81 // pred_fallthru
          _
      $region82: #{tpu_custom_call.1} parent=5 // pred_fallthru
        _
      %p547 = scmp.le.s32.totalorder 2, %s16
      // Predicated region
      $region99: #{tpu_custom_call.1} parent=5 // pred_check
        %p548 = pneg %p547
      $region100: #{tpu_custom_call.1} parent=5 // pred_check_branch
        %550 = sbr.rel (%p548) target = $region102
      $region101: #{tpu_custom_call.1} parent=5 // pred_region
        %s551 = ssub.s32 %s16, 2
        // Predicated region
        $region103: #{tpu_custom_call.1} parent=101 // pred_check
          %p552 = pneg %p224
        $region104: #{tpu_custom_call.1} parent=101 // pred_check_branch
          %554 = sbr.rel (%p552) target = $region106
        $region105: #{tpu_custom_call.1} parent=101 // pred_region
          %s555 = sand.u32 %s209, 1
          %s556 = scalar_lea.sflag [#allocation6], %s555
          %s557 = sand.u32 %s209, 1
          %s558 = smul.addr %s557, 8
          %s559 = scalar_lea.vmem [#allocation5], %s558
          %561 = dma.done %s556, 128
        $region106: #{tpu_custom_call.1} parent=101 // pred_fallthru
          _
      $region102: #{tpu_custom_call.1} parent=5 // pred_fallthru
        _
    $region6: #{tpu_custom_call.1} parent=1 // loop_footer
      %s20 = sadd.s32 1, %s16
    $region7: #{tpu_custom_call.1} parent=1 // loop_footer_branch
      %15 = sbr.rel target = $region3
    $region8: #{tpu_custom_call.1} parent=1 // loop_exit
      _
    %562 = vsyncpa [#allocation6], 1
    %s563 = scalar_lea.sflag [#allocation6], 1
    %564 = vsyncpa %s563, 1

</llo_original>
